<compile_context>
chip_gen: v6e
topology: v6e:2x2x1
jax: 0.10.0
libtpu: 0.0.40
codegen_flags: <defaults>
</compile_context>

<pallas_src>
import functools

import jax
import jax.numpy as jnp
from jax.experimental import pallas as pl
from jax.experimental.pallas import tpu as pltpu


# ----------------------------- Pallas kernels ------------------------------ #

def bn_resident_kernel(x_ref, p_ref, y_ref, stats_ref, *, eps, inv_b):
    """Fully fused BN: x resident in VMEM, 1 HBM read + 1 HBM write of x.

    p_ref     : (2, D)  row 0 = log_gamma, row 1 = beta
    stats_ref : (3, D)  row 0 = ildj, row 1 = batch mean, row 2 = batch var (+eps)
    """
    x = x_ref[...].astype(jnp.float32)                           # (B, D)
    mean = jnp.sum(x, axis=0, keepdims=True) * inv_b             # (1, D)
    xc = x - mean
    var = jnp.sum(xc * xc, axis=0, keepdims=True) * inv_b + eps  # stable two-pass form
    log_gamma = p_ref[0:1, :]
    beta = p_ref[1:2, :]
    scale = jnp.exp(log_gamma) * jax.lax.rsqrt(var)              # EUP
    y_ref[...] = (xc * scale + beta).astype(y_ref.dtype)
    stats_ref[0:1, :] = -log_gamma + 0.5 * jnp.log(var)
    stats_ref[1:2, :] = mean
    stats_ref[2:3, :] = var


def bn_tiled_kernel(x_ref, p_ref, y_ref, stats_ref, acc_ref, sb_ref, *,
                    eps, batch, block_b, ragged):
    """Fused two-pass BN over batch tiles in a single pallas_call.

    grid = (2, num_tiles): pass 0 = stats accumulation, pass 1 = apply affine.
    acc_ref : (2, D) VMEM scratch  row 0 = sum(x), row 1 = sum(x*x)
    sb_ref  : (2, D) VMEM scratch  row 0 = scale,  row 1 = bias (mean folded in)
    """
    p = pl.program_id(0)
    i = pl.program_id(1)
    nt = pl.num_programs(1)

    @pl.when(p == 0)
    def _stats_pass():
        x = x_ref[...].astype(jnp.float32)                       # (block_b, D)
        if ragged:                                               # static Python branch
            rows = jax.lax.broadcasted_iota(jnp.int32, x.shape, 0) + i * block_b
            x = jnp.where(rows < batch, x, 0.0)
        s = jnp.sum(x, axis=0, keepdims=True)
        sq = jnp.sum(x * x, axis=0, keepdims=True)

        @pl.when(i == 0)
        def _():
            acc_ref[0:1, :] = s
            acc_ref[1:2, :] = sq

        @pl.when(i > 0)
        def _():
            acc_ref[0:1, :] = acc_ref[0:1, :] + s
            acc_ref[1:2, :] = acc_ref[1:2, :] + sq

        @pl.when(i == nt - 1)
        def _finalize():
            inv_b = 1.0 / batch                    # masked tail rows contribute zero
            mean = acc_ref[0:1, :] * inv_b
            # E[x^2]-mean^2 can cancel slightly negative in f32; clamp before +eps.
            var = jnp.maximum(acc_ref[1:2, :] * inv_b - mean * mean, 0.0) + eps
            log_gamma = p_ref[0:1, :]
            beta = p_ref[1:2, :]
            scale = jnp.exp(log_gamma) * jax.lax.rsqrt(var)      # EUP
            sb_ref[0:1, :] = scale
            sb_ref[1:2, :] = beta - mean * scale                 # fold mean into bias
            stats_ref[0:1, :] = -log_gamma + 0.5 * jnp.log(var)
            stats_ref[1:2, :] = mean
            stats_ref[2:3, :] = var

    @pl.when(p == 1)
    def _apply_pass():
        y_ref[...] = (x_ref[...].astype(jnp.float32) * sb_ref[0:1, :]
                      + sb_ref[1:2, :]).astype(y_ref.dtype)


# ------------------------------ JAX wrapper -------------------------------- #

def _choose_block_b(b, d, target_bytes=2 << 20):
    """Batch-tile rows such that one x tile is ~target_bytes (f32), sublane aligned."""
    if b <= 8:
        return b
    bb = max(8, (target_bytes // (4 * max(d, 1))) // 8 * 8)
    bb = min(bb, (b // 8) * 8)
    return int(max(bb, 8))


def batch_norm_forward(x, log_gamma, beta, running_mean, running_var, *,
                       eps=1e-5, momentum=0.01, block_b=None, force_tiled=False):
    """Training-mode forward of BatchNormLayer.

    Returns (y, ildj, new_running_mean, new_running_var)."""
    x2 = jnp.squeeze(x, axis=1) if x.ndim == 3 else x            # (B, D)
    b, d = x2.shape

    # log_gamma / beta packed into one small (2, D) array -> one DMA.
    params = jnp.stack([log_gamma.astype(jnp.float32),
                        beta.astype(jnp.float32)], axis=0)       # (2, D)

    out_shape = (jax.ShapeDtypeStruct((b, d), x2.dtype),
                 jax.ShapeDtypeStruct((3, d), jnp.float32))

    use_resident = (not force_tiled) and (b * d * 4 <= (4 << 20))

    if use_resident:
        # x + y + a couple of full-size temporaries, generous but capped headroom.
        vmem_limit = int(min(max(6 * b * d * 4 + (2 << 20), 8 << 20), 48 << 20))
        y2, stats = pl.pallas_call(
            functools.partial(bn_resident_kernel, eps=float(eps), inv_b=1.0 / b),
            out_shape=out_shape,
            grid_spec=pltpu.PrefetchScalarGridSpec(
                num_scalar_prefetch=0,
                grid=(1,),
                in_specs=[pl.BlockSpec((b, d), lambda i: (0, 0)),
                          pl.BlockSpec((2, d), lambda i: (0, 0))],
                out_specs=[pl.BlockSpec((b, d), lambda i: (0, 0)),
                           pl.BlockSpec((3, d), lambda i: (0, 0))]),
            compiler_params=pltpu.CompilerParams(
                dimension_semantics=("arbitrary",),
                vmem_limit_bytes=vmem_limit),
        )(x2, params)
    else:
        bb = block_b if block_b is not None else _choose_block_b(b, d)
        bb = int(min(bb, b)) if b <= 8 else int(bb)
        num_tiles = int(pl.cdiv(b, bb))
        ragged = (b % bb) != 0
        tile_bytes = bb * d * 4
        # 2x double-buffered input tile + 2x output tile + params/stats/scratch.
        vmem_limit = int(min(max(8 * tile_bytes + (2 << 20), 16 << 20), 48 << 20))

        y2, stats = pl.pallas_call(
            functools.partial(bn_tiled_kernel, eps=float(eps), batch=b,
                              block_b=bb, ragged=ragged),
            out_shape=out_shape,
            grid_spec=pltpu.PrefetchScalarGridSpec(
                num_scalar_prefetch=0,
                grid=(2, num_tiles),
                in_specs=[pl.BlockSpec((bb, d), lambda p, i: (i, 0)),
                          pl.BlockSpec((2, d), lambda p, i: (0, 0))],
                out_specs=[
                    # During pass 0 the y block index is held at 0 (no HBM writeback);
                    # during pass 1 it tracks the tile -> y written exactly once.
                    pl.BlockSpec((bb, d), lambda p, i: (i * p, 0)),
                    pl.BlockSpec((3, d), lambda p, i: (0, 0))],
                scratch_shapes=[pltpu.VMEM((2, d), jnp.float32),
                                pltpu.VMEM((2, d), jnp.float32)]),
            compiler_params=pltpu.CompilerParams(
                dimension_semantics=("arbitrary", "arbitrary"),
                vmem_limit_bytes=vmem_limit),
        )(x2, params)

    ildj = stats[0, :]
    batch_mean = stats[1, :]
    batch_var = stats[2, :]

    # In-place buffer mutation from the torch module, done functionally here.
    new_rm = momentum * running_mean + (1.0 - momentum) * batch_mean
    new_rv = momentum * running_var + (1.0 - momentum) * batch_var
    # TODO(synk): eval-mode branch (normalize with running stats) is just a different
    # precomputed affine; only the training-mode path is implemented here.

    return y2[:, None, :], ildj[None, None, :], new_rm, new_rv


# --------------------------- pure-JAX reference ----------------------------- #

def batch_norm_reference(x, log_gamma, beta, running_mean, running_var, *,
                         eps=1e-5, momentum=0.01):
    inp = jnp.squeeze(x, axis=1)
    mean = jnp.mean(inp, axis=0)
    var = jnp.mean((inp - mean) ** 2, axis=0) + eps
    x_hat = (inp - mean) / jnp.sqrt(var)
    y = jnp.exp(log_gamma) * x_hat + beta
    ildj = -log_gamma + 0.5 * jnp.log(var)
    new_rm = momentum * running_mean + (1.0 - momentum) * mean
    new_rv = momentum * running_var + (1.0 - momentum) * var
    return y[:, None, :], ildj[None, None, :], new_rm, new_rv


# --------------------------------- main ------------------------------------ #

if __name__ == "__main__":
    key = jax.random.PRNGKey(0)

    def make_case(k, B, D):
        kx, kg, kb = jax.random.split(k, 3)
        x = jax.random.normal(kx, (B, 1, D), jnp.float32)        # module sees (B, 1, D)
        log_gamma = jax.random.uniform(kg, (D,), jnp.float32)    # torch.rand init
        beta = jax.random.uniform(kb, (D,), jnp.float32)
        rm = jnp.zeros((D,), jnp.float32)
        rv = jnp.ones((D,), jnp.float32)
        return x, log_gamma, beta, rm, rv

    def check(out, ref):
        for got, want in zip(out, ref):
            assert got.shape == want.shape, (got.shape, want.shape)
            assert jnp.allclose(got, want, rtol=1e-4, atol=1e-4), \
                float(jnp.max(jnp.abs(got - want)))

    k1, k2 = jax.random.split(key)

    # Case 1: small (B=32, D=20) -> fully fused resident path, no padding anywhere.
    args1 = make_case(k1, 32, 20)
    out1 = jax.block_until_ready(batch_norm_forward(*args1))
    check(out1, batch_norm_reference(*args1))

    # Case 2: same data, forced tiled path with evenly dividing batch tiles.
    out2 = jax.block_until_ready(
        batch_norm_forward(*args1, force_tiled=True, block_b=8))
    check(out2, batch_norm_reference(*args1))

    # Case 3: ragged batch tiles (300 % 128 != 0) and non-128 feature dim (D=36),
    # exercising the in-kernel tail mask and edge-block clipping of the tiled path.
    args3 = make_case(k2, 300, 36)
    out3 = jax.block_until_ready(
        batch_norm_forward(*args3, force_tiled=True, block_b=128))
    check(out3, batch_norm_reference(*args3))

    print("KERNEL_OK")
</pallas_src>

<mosaic_0001>
module attributes {stable_mosaic.version = 11 : i64} {
  func.func @bn_resident_kernel(%arg0: i32, %arg1: memref<32x20xf32, #tpu.memory_space<vmem>>, %arg2: memref<2x20xf32, #tpu.memory_space<vmem>>, %arg3: memref<32x20xf32, #tpu.memory_space<vmem>>, %arg4: memref<3x20xf32, #tpu.memory_space<vmem>>) attributes {dimension_semantics = [#tpu.dimension_semantics<arbitrary>], iteration_bounds = array<i64: 1>, scalar_prefetch = 0 : i64, scratch_operands = 0 : i64, tpu.core_type = #tpu.core_type<tc>, window_params = [{pipeline_mode = #tpu.pipeline_mode<synchronous>, transform_indices = @transform_0, window_bounds = array<i64: 32, 20>}, {pipeline_mode = #tpu.pipeline_mode<synchronous>, transform_indices = @transform_1, window_bounds = array<i64: 2, 20>}, {pipeline_mode = #tpu.pipeline_mode<synchronous>, transform_indices = @transform_2, window_bounds = array<i64: 32, 20>}, {pipeline_mode = #tpu.pipeline_mode<synchronous>, transform_indices = @transform_3, window_bounds = array<i64: 3, 20>}]} {
    %c0 = arith.constant 0 : index
    %c0_0 = arith.constant 0 : index
    %0 = vector.load %arg1[%c0, %c0_0] : memref<32x20xf32, #tpu.memory_space<vmem>>, vector<32x20xf32>
    %cst = arith.constant dense<0.000000e+00> : vector<20xf32>
    %1 = vector.multi_reduction <add>, %0, %cst [0] : vector<32x20xf32> to vector<20xf32>
    %2 = vector.shape_cast %1 : vector<20xf32> to vector<1x20xf32>
    %cst_1 = arith.constant 3.125000e-02 : f32
    %3 = vector.broadcast %cst_1 : f32 to vector<1x20xf32>
    %4 = arith.mulf %2, %3 : vector<1x20xf32>
    %5 = vector.broadcast %4 : vector<1x20xf32> to vector<32x20xf32>
    %6 = arith.subf %0, %5 : vector<32x20xf32>
    %7 = arith.mulf %6, %6 : vector<32x20xf32>
    %cst_2 = arith.constant dense<0.000000e+00> : vector<20xf32>
    %8 = vector.multi_reduction <add>, %7, %cst_2 [0] : vector<32x20xf32> to vector<20xf32>
    %9 = vector.shape_cast %8 : vector<20xf32> to vector<1x20xf32>
    %cst_3 = arith.constant 3.125000e-02 : f32
    %10 = vector.broadcast %cst_3 : f32 to vector<1x20xf32>
    %11 = arith.mulf %9, %10 : vector<1x20xf32>
    %cst_4 = arith.constant 9.99999974E-6 : f32
    %12 = vector.broadcast %cst_4 : f32 to vector<1x20xf32>
    %13 = arith.addf %11, %12 : vector<1x20xf32>
    %c0_5 = arith.constant 0 : index
    %c0_6 = arith.constant 0 : index
    %14 = vector.load %arg2[%c0_5, %c0_6] : memref<2x20xf32, #tpu.memory_space<vmem>>, vector<1x20xf32>
    %c1 = arith.constant 1 : index
    %c0_7 = arith.constant 0 : index
    %15 = vector.load %arg2[%c1, %c0_7] : memref<2x20xf32, #tpu.memory_space<vmem>>, vector<1x20xf32>
    %16 = math.exp %14 : vector<1x20xf32>
    %17 = math.rsqrt %13 : vector<1x20xf32>
    %18 = arith.mulf %16, %17 : vector<1x20xf32>
    %19 = vector.broadcast %18 : vector<1x20xf32> to vector<32x20xf32>
    %20 = arith.mulf %6, %19 : vector<32x20xf32>
    %21 = vector.broadcast %15 : vector<1x20xf32> to vector<32x20xf32>
    %22 = arith.addf %20, %21 : vector<32x20xf32>
    %c0_8 = arith.constant 0 : index
    %c0_9 = arith.constant 0 : index
    %23 = vector.load %arg3[%c0_8, %c0_9] : memref<32x20xf32, #tpu.memory_space<vmem>>, vector<32x20xf32>
    tpu.vector_store %arg3[%c0_8, %c0_9], %22 {strides = array<i32>} : memref<32x20xf32, #tpu.memory_space<vmem>>, vector<32x20xf32>,
    %cst_10 = arith.constant 0.000000e+00 : f32
    %24 = vector.broadcast %cst_10 : f32 to vector<1x20xf32>
    %25 = arith.subf %24, %14 : vector<1x20xf32>
    %26 = math.log %13 : vector<1x20xf32>
    %cst_11 = arith.constant 5.000000e-01 : f32
    %27 = vector.broadcast %cst_11 : f32 to vector<1x20xf32>
    %28 = arith.mulf %27, %26 : vector<1x20xf32>
    %29 = arith.addf %25, %28 : vector<1x20xf32>
    %c0_12 = arith.constant 0 : index
    %c0_13 = arith.constant 0 : index
    %30 = vector.load %arg4[%c0_12, %c0_13] : memref<3x20xf32, #tpu.memory_space<vmem>>, vector<1x20xf32>
    tpu.vector_store %arg4[%c0_12, %c0_13], %29 {strides = array<i32>} : memref<3x20xf32, #tpu.memory_space<vmem>>, vector<1x20xf32>,
    %c1_14 = arith.constant 1 : index
    %c0_15 = arith.constant 0 : index
    %31 = vector.load %arg4[%c1_14, %c0_15] : memref<3x20xf32, #tpu.memory_space<vmem>>, vector<1x20xf32>
    tpu.vector_store %arg4[%c1_14, %c0_15], %4 {strides = array<i32>} : memref<3x20xf32, #tpu.memory_space<vmem>>, vector<1x20xf32>,
    %c2 = arith.constant 2 : index
    %c0_16 = arith.constant 0 : index
    %32 = vector.load %arg4[%c2, %c0_16] : memref<3x20xf32, #tpu.memory_space<vmem>>, vector<1x20xf32>
    tpu.vector_store %arg4[%c2, %c0_16], %13 {strides = array<i32>} : memref<3x20xf32, #tpu.memory_space<vmem>>, vector<1x20xf32>,
    return
  }
  func.func @transform_0(%arg0: i32) -> (i32, i32) {
    %c0_i32 = arith.constant 0 : i32
    %c0_i32_0 = arith.constant 0 : i32
    %c0_i32_1 = arith.constant 0 : i32
    return %c0_i32, %c0_i32_0 : i32, i32
  }
  func.func @transform_1(%arg0: i32) -> (i32, i32) {
    %c0_i32 = arith.constant 0 : i32
    %c0_i32_0 = arith.constant 0 : i32
    %c0_i32_1 = arith.constant 0 : i32
    return %c0_i32, %c0_i32_0 : i32, i32
  }
  func.func @transform_2(%arg0: i32) -> (i32, i32) {
    %c0_i32 = arith.constant 0 : i32
    %c0_i32_0 = arith.constant 0 : i32
    %c0_i32_1 = arith.constant 0 : i32
    return %c0_i32, %c0_i32_0 : i32, i32
  }
  func.func @transform_3(%arg0: i32) -> (i32, i32) {
    %c0_i32 = arith.constant 0 : i32
    %c0_i32_0 = arith.constant 0 : i32
    %c0_i32_1 = arith.constant 0 : i32
    return %c0_i32, %c0_i32_0 : i32, i32
  }
}

</mosaic_0001>

<llo_original>
// kernel: tpu_custom_call.1
$region0: #{tpu_custom_call.1}
  #allocation0 [shape = 'u32[]', space=smem, size = 0x4, offset = 0x4, fixed_abs, tag = 'smem constant byte address 0x4 - core index']
  #allocation1 [shape = 'u32[144,128]{1,0:T(1,128)}', space=vmem, size = 0x12000, scoped, tag = 'internal scratch']
  %s0 = inlined_call_operand.vmem [shape: f32[32,20], index: 0, kind: input, shape index: {}]
  %s1 = inlined_call_operand.vmem [shape: f32[2,20], index: 1, kind: input, shape index: {}]
  %s2 = inlined_call_operand.vmem [shape: f32[32,20], index: 2, kind: output, shape index: {0}]
  %s3 = inlined_call_operand.hbm [shape: f32[3,20], index: 3, kind: output, shape index: {1}]
  %4 = xla_tuple %s2, %s3
  %s5 = sld [smem:[#allocation0]]
  $region26: #{tpu_custom_call.1} parent=0
    _
  %s7 = ssub.s32 1, %s5
  %s8 = scalar_select 0, %s7, %s5
  $region1: #{tpu_custom_call.1} parent=0
    #allocation2 [shape = 'u8[2048]{0}', space=vmem, size = 0x800, scoped, tag = 'output window, operand 1, single buffered']
    #allocation3 [shape = 's32[1]{0}', space=sflag, size = 0x4, scoped, tag = 'scoped memory for tpu_custom_call.1']
    %9 = vsyncpa [#allocation3], 0
    // Predicated region
    $region2: #{tpu_custom_call.1} parent=1 // pred_check
      _
    $region3: #{tpu_custom_call.1} parent=1 // pred_check_branch
      %11 = sbr.rel (0) target = $region5
    $region4: #{tpu_custom_call.1} parent=1 // pred_region
      _
    $region5: #{tpu_custom_call.1} parent=1 // pred_fallthru
      _
    // Predicated region
    $region6: #{tpu_custom_call.1} parent=1 // pred_check
      _
    $region7: #{tpu_custom_call.1} parent=1 // pred_check_branch
      %13 = sbr.rel (0) target = $region9
    $region8: #{tpu_custom_call.1} parent=1 // pred_region
      _
    $region9: #{tpu_custom_call.1} parent=1 // pred_fallthru
      _
    %v14 = vld [vmem:[%s0] sm:$0xff]
    %v15 = vld [vmem:[%s0 + $0x8] sm:$0xff]
    %v16 = vld [vmem:[%s0 + $0x10] sm:$0xff]
    %v17 = vld [vmem:[%s0 + $0x18] sm:$0xff]
    %vm18 = vcmask 162816
    %v19 = vsel %vm18, %v14, 0.0
    %v20 = vsel %vm18, %v15, 0.0
    %v21 = vadd.f32 %v19, %v20
    %v22 = vsel %vm18, %v16, 0.0
    %v23 = vadd.f32 %v21, %v22
    %v24 = vsel %vm18, %v17, 0.0
    %v25 = vadd.f32 %v23, %v24
    %v26 = vrot.slane %v25, 4
    %v27 = vadd.f32 %v25, %v26
    %v28 = vrot.slane %v27, 2
    %v29 = vadd.f32 %v27, %v28
    %v30 = vrot.slane %v29, 1
    %v31 = vadd.f32 %v29, %v30
    %v32 = vmul.f32 %v31, 0.03125
    %v33 = vsub.f32 %v14, %v32
    %v34 = vsub.f32 %v15, %v32
    %v35 = vsub.f32 %v16, %v32
    %v36 = vsub.f32 %v17, %v32
    %v37 = vmul.f32 %v33, %v33
    %v38 = vmul.f32 %v34, %v34
    %v39 = vmul.f32 %v35, %v35
    %v40 = vmul.f32 %v36, %v36
    %v41 = vsel %vm18, %v37, 0.0
    %v42 = vsel %vm18, %v38, 0.0
    %v43 = vadd.f32 %v41, %v42
    %v44 = vsel %vm18, %v39, 0.0
    %v45 = vadd.f32 %v43, %v44
    %v46 = vsel %vm18, %v40, 0.0
    %v47 = vadd.f32 %v45, %v46
    %v48 = vrot.slane %v47, 4
    %v49 = vadd.f32 %v47, %v48
    %v50 = vrot.slane %v49, 2
    %v51 = vadd.f32 %v49, %v50
    %v52 = vrot.slane %v51, 1
    %v53 = vadd.f32 %v51, %v52
    %v54 = vmul.f32 %v53, 0.03125
    %v55 = vadd.f32 %v54, 1e-05
    %v56 = vld [vmem:[%s1] sm:$0x1]
    %v57 = vld [vmem:[%s1 + $0x1] sm:$0x1]
    %v58 = vmul.f32 %v56, 1.442695
    %v59 = vpow.pop %v58
    %v60 = vrsqrt.pop %v55
    %v61 = vmul.f32 %v59, %v60
    %v62 = vlaneseq
    %v63 = vshrl.u32 %v62, 7
    %v64 = vsub.s32 0, %v63
    %v65 = vrot.slane %v61, %v64
    %v66 = vmul.f32 %v33, %v65
    %v67 = vmul.f32 %v34, %v65
    %v68 = vmul.f32 %v35, %v65
    %v69 = vmul.f32 %v36, %v65
    %v70 = vlaneseq
    %v71 = vshrl.u32 %v70, 7
    %v72 = vsub.s32 0, %v71
    %v73 = vrot.slane %v57, %v72
    %v74 = vadd.f32 %v66, %v73
    %v75 = vadd.f32 %v67, %v73
    %v76 = vadd.f32 %v68, %v73
    %v77 = vadd.f32 %v69, %v73
    %78 = vst.msk [vmem:[%s2] sm:$0xff] %vm18, %v74
    %79 = vst.msk [vmem:[%s2 + $0x8] sm:$0xff] %vm18, %v75
    %80 = vst.msk [vmem:[%s2 + $0x10] sm:$0xff] %vm18, %v76
    %81 = vst.msk [vmem:[%s2 + $0x18] sm:$0xff] %vm18, %v77
    %v82 = vsub.f32 0.0, %v56
    %v83 = vlog2.pop %v55
    %v84 = vmul.f32 %v83, 0.6931472
    %v85 = vmul.f32 %v84, 0.5
    %v86 = vadd.f32 %v82, %v85
    %vm87 = vcmask 155648
    %88 = vst.msk [vmem:[#allocation2] sm:$0x1] %vm87, %v86
    %89 = vst.msk [vmem:[#allocation2 + $0x1] sm:$0x1] %vm87, %v32
    %90 = vst.msk [vmem:[#allocation2 + $0x2] sm:$0x1] %vm87, %v55
    // Predicated region
    $region10: #{tpu_custom_call.1} parent=1 // pred_check
      _
    $region11: #{tpu_custom_call.1} parent=1 // pred_check_branch
      %92 = sbr.rel (0) target = $region13
    $region12: #{tpu_custom_call.1} parent=1 // pred_region
      _
    $region13: #{tpu_custom_call.1} parent=1 // pred_fallthru
      _
    // Predicated region
    $region14: #{tpu_custom_call.1} parent=1 // pred_check
      _
    $region15: #{tpu_custom_call.1} parent=1 // pred_check_branch
      %94 = sbr.rel (0) target = $region17
    $region16: #{tpu_custom_call.1} parent=1 // pred_region
      %s96 = ssub.s32 64, 64
      %97 = vsyncadd [#allocation3], %s96
      %s99 = sshll.u32 [#allocation2], 4
      %s100 = int_to_ptr.vmem [resolvable:$true] %s99
      %102 = dma.vmem_to_hbm [thread:$0]  %s100, 64, %s3, [#allocation3]
    $region17: #{tpu_custom_call.1} parent=1 // pred_fallthru
      _
    // Predicated region
    $region18: #{tpu_custom_call.1} parent=1 // pred_check
      _
    $region19: #{tpu_custom_call.1} parent=1 // pred_check_branch
      %104 = sbr.rel (0) target = $region21
    $region20: #{tpu_custom_call.1} parent=1 // pred_region
      _
    $region21: #{tpu_custom_call.1} parent=1 // pred_fallthru
      _
    // Predicated region
    $region22: #{tpu_custom_call.1} parent=1 // pred_check
      _
    $region23: #{tpu_custom_call.1} parent=1 // pred_check_branch
      %106 = sbr.rel (0) target = $region25
    $region24: #{tpu_custom_call.1} parent=1 // pred_region
      %107 = dma.done [#allocation3], 64
    $region25: #{tpu_custom_call.1} parent=1 // pred_fallthru
      _
    %108 = vsyncpa [#allocation3], 1

</llo_original>
